<compile_context>
chip_gen: v5e
topology: v5e:2x2
jax: 0.10.0
libtpu: 0.0.40
codegen_flags: <defaults>
</compile_context>

<pallas_src>
import functools
import math

import jax
import jax.numpy as jnp
import numpy as np
from jax.experimental import pallas as pl
from jax.experimental.pallas import tpu as pltpu


# ----------------------------------------------------------------------------- kernel
def temporal_encoder_kernel(x_ref, wqkv_ref, bqkv_ref, wout_ref, bout_ref,
                            o_ref, *, batch, lag, dim, num_heads):
    """Single grid step.

    x_ref            : (B*L, D)   flattened activations
    wqkv_ref         : (D, 3D)    fused (W1 -> Wq|Wk|Wv) weight, Q third pre-scaled
    bqkv_ref         : (B*L, 3D)  fused per-row bias (embedding + Linear#1 + qkv biases)
    wout_ref/bout_ref: (D, D)/(1, D) fused (Wo -> W2) output projection
    """
    n = batch * lag
    dh = dim // num_heads

    # fused (embedding-add + Linear#1 + QKV projection): one (N, D) @ (D, 3D) GEMM.
    # Q is pre-scaled by 1/sqrt(dh) via the weight/bias fusion in the wrapper.
    qkv = jnp.dot(x_ref[...], wqkv_ref[...],
                  preferred_element_type=jnp.float32) + bqkv_ref[...]       # (N, 3D)

    q = qkv[:, 0 * dim:1 * dim].reshape(batch, lag, dim)                    # (B, L, D)
    k = qkv[:, 1 * dim:2 * dim].reshape(batch, lag, dim)
    v = qkv[:, 2 * dim:3 * dim].reshape(batch, lag, dim)

    # multi-head self-attention over the lag axis, batched over B per head.
    head_outs = []
    for h in range(num_heads):                                              # static unroll
        sl = slice(h * dh, (h + 1) * dh)
        qh, kh, vh = q[..., sl], k[..., sl], v[..., sl]                     # (B, L, dh)
        s = jnp.einsum('bld,bmd->blm', qh, kh,
                       preferred_element_type=jnp.float32)                  # (B, L, L)
        s = s - jnp.max(s, axis=-1, keepdims=True)                          # stable softmax
        p = jnp.exp(s)
        p = p / jnp.sum(p, axis=-1, keepdims=True)
        oh = jnp.einsum('blm,bmd->bld', p, vh,
                        preferred_element_type=jnp.float32)                 # (B, L, dh)
        head_outs.append(oh.reshape(n, dh))
    attn = jnp.concatenate(head_outs, axis=-1)                              # (N, D)

    # fused (attention-output-projection + Linear#2): one (N, D) @ (D, D) GEMM.
    y = jnp.dot(attn, wout_ref[...],
                preferred_element_type=jnp.float32) + bout_ref[...]         # (N, D)
    o_ref[...] = y.astype(o_ref.dtype)


# ----------------------------------------------------------------------------- wrapper
def temporal_encoder(x, params, *, num_heads):
    b, l, d = x.shape
    dh = d // num_heads
    scale = 1.0 / math.sqrt(dh)
    (emb, w1, b1, wq, bq, wk, bk, wv, bv, wo, bo, w2, b2) = params

    # --- offline algebraic fusion (exact in real arithmetic) ------------------------
    # Linear#1 folded into Q/K/V:   h @ Wq + bq == (x+emb) @ (W1 @ Wq) + (b1 @ Wq + bq)
    wq_f, bq_f = w1 @ wq, b1 @ wq + bq
    wk_f, bk_f = w1 @ wk, b1 @ wk + bk
    wv_f, bv_f = w1 @ wv, b1 @ wv + bv
    # fold the 1/sqrt(dh) attention scale into the Q projection
    wq_f, bq_f = wq_f * scale, bq_f * scale
    wqkv = jnp.concatenate([wq_f, wk_f, wv_f], axis=1)                      # (D, 3D)
    # temporal-embedding add folded into a per-lag-row QKV bias, tiled over batch
    bias_rows = jnp.concatenate([emb @ wq_f + bq_f,
                                 emb @ wk_f + bk_f,
                                 emb @ wv_f + bv_f], axis=1)                # (L, 3D)
    bqkv = jnp.tile(bias_rows, (b, 1))                                      # (B*L, 3D)
    # attention output projection folded into Linear#2
    wout = wo @ w2                                                          # (D, D)
    bout = bo @ w2 + b2                                                     # (1, D)

    # flatten batch*lag into the GEMM row dimension
    x_flat = x.reshape(b * l, d)

    def full(shape):
        return pl.BlockSpec(shape, lambda i: (0,) * len(shape))

    kernel = functools.partial(temporal_encoder_kernel,
                               batch=b, lag=l, dim=d, num_heads=num_heads)
    out = pl.pallas_call(
        kernel,
        out_shape=jax.ShapeDtypeStruct((b * l, d), x.dtype),
        grid=(1,),                                          # single step: workload is tiny
        in_specs=[
            full((b * l, d)),      # x (flattened)
            full((d, 3 * d)),      # fused (emb-add + W1 -> QKV) weight, Q pre-scaled
            full((b * l, 3 * d)),  # fused per-row QKV bias (embedding folded in)
            full((d, d)),          # fused (Wo -> W2) weight
            full((1, d)),          # fused output bias
        ],
        out_specs=full((b * l, d)),
        compiler_params=pltpu.CompilerParams(
            dimension_semantics=("arbitrary",)),
    )(x_flat, wqkv, bqkv, wout, bout)
    return out.reshape(b, l, d)


# ----------------------------------------------------------------------------- params
def init_params(key, lag, dim):
    """Deterministic synthetic parameters. Weights are (in, out); biases are (1, out)."""
    ks = jax.random.split(key, 16)
    scale = 1.0 / math.sqrt(dim)

    def w(k):
        return jax.random.uniform(k, (dim, dim), jnp.float32, -scale, scale)

    def bvec(k):
        return jax.random.uniform(k, (1, dim), jnp.float32, -scale, scale)

    emb = jax.random.normal(ks[0], (lag, dim), jnp.float32)   # temp_embedding (1, lag, dim) squeezed
    w1, b1 = w(ks[1]), bvec(ks[2])
    wq, bq = w(ks[3]), bvec(ks[4])
    wk, bk = w(ks[5]), bvec(ks[6])
    wv, bv = w(ks[7]), bvec(ks[8])
    wo, bo = w(ks[9]), bvec(ks[10])
    w2, b2 = w(ks[11]), bvec(ks[12])
    return (emb, w1, b1, wq, bq, wk, bk, wv, bv, wo, bo, w2, b2)


# ----------------------------------------------------------------------------- reference
def reference(x, params, *, num_heads):
    """Pure-JAX reference in the original (unfused) operation order."""
    (emb, w1, b1, wq, bq, wk, bk, wv, bv, wo, bo, w2, b2) = params
    xb = x + emb[None]
    h = xb @ w1 + b1
    q, k, v = h @ wq + bq, h @ wk + bk, h @ wv + bv
    b_, l_, d_ = q.shape
    dh = d_ // num_heads
    qh = q.reshape(b_, l_, num_heads, dh).transpose(0, 2, 1, 3)
    kh = k.reshape(b_, l_, num_heads, dh).transpose(0, 2, 1, 3)
    vh = v.reshape(b_, l_, num_heads, dh).transpose(0, 2, 1, 3)
    s = jnp.einsum('bhqd,bhkd->bhqk', qh, kh) / math.sqrt(dh)
    p = jax.nn.softmax(s, axis=-1)
    o = jnp.einsum('bhqk,bhkd->bhqd', p, vh)
    o = o.transpose(0, 2, 1, 3).reshape(b_, l_, d_)
    o = o @ wo + bo
    return o @ w2 + b2


# ----------------------------------------------------------------------------- main
if __name__ == "__main__":
    B, LAG, DIM, NUM_HEADS = 2, 8, 32, 4

    key = jax.random.PRNGKey(0)
    kx, kp = jax.random.split(key)
    x = jax.random.normal(kx, (B, LAG, DIM), jnp.float32)
    params = init_params(kp, LAG, DIM)

    out = temporal_encoder(x, params, num_heads=NUM_HEADS)
    out = jax.block_until_ready(out)

    ref = reference(x, params, num_heads=NUM_HEADS)
    np.testing.assert_allclose(np.asarray(out), np.asarray(ref), rtol=1e-4, atol=1e-4)

    print("KERNEL_OK")
</pallas_src>

<mosaic_0001>
module attributes {stable_mosaic.version = 11 : i64} {
  func.func @temporal_encoder_kernel(%arg0: i32, %arg1: memref<16x32xf32, #tpu.memory_space<vmem>>, %arg2: memref<32x96xf32, #tpu.memory_space<vmem>>, %arg3: memref<16x96xf32, #tpu.memory_space<vmem>>, %arg4: memref<32x32xf32, #tpu.memory_space<vmem>>, %arg5: memref<1x32xf32, #tpu.memory_space<vmem>>, %arg6: memref<16x32xf32, #tpu.memory_space<vmem>>) attributes {dimension_semantics = [#tpu.dimension_semantics<arbitrary>], iteration_bounds = array<i64: 1>, scalar_prefetch = 0 : i64, scratch_operands = 0 : i64, tpu.core_type = #tpu.core_type<tc>, window_params = [{pipeline_mode = #tpu.pipeline_mode<synchronous>, transform_indices = @transform_0, window_bounds = array<i64: 16, 32>}, {pipeline_mode = #tpu.pipeline_mode<synchronous>, transform_indices = @transform_1, window_bounds = array<i64: 32, 96>}, {pipeline_mode = #tpu.pipeline_mode<synchronous>, transform_indices = @transform_2, window_bounds = array<i64: 16, 96>}, {pipeline_mode = #tpu.pipeline_mode<synchronous>, transform_indices = @transform_3, window_bounds = array<i64: 32, 32>}, {pipeline_mode = #tpu.pipeline_mode<synchronous>, transform_indices = @transform_4, window_bounds = array<i64: 1, 32>}, {pipeline_mode = #tpu.pipeline_mode<synchronous>, transform_indices = @transform_5, window_bounds = array<i64: 16, 32>}]} {
    %c0 = arith.constant 0 : index
    %c0_0 = arith.constant 0 : index
    %0 = vector.load %arg1[%c0, %c0_0] : memref<16x32xf32, #tpu.memory_space<vmem>>, vector<16x32xf32>
    %c0_1 = arith.constant 0 : index
    %c0_2 = arith.constant 0 : index
    %1 = vector.load %arg2[%c0_1, %c0_2] : memref<32x96xf32, #tpu.memory_space<vmem>>, vector<32x96xf32>
    %cst = arith.constant dense<0.000000e+00> : vector<16x96xf32>
    %2 = tpu.matmul %0, %1, %cst {dimension_numbers = #tpu.dot_dimension_numbers<[1], [0], [0], [1], [0, 0, 1, 1], [], []>} : vector<16x32xf32>, vector<32x96xf32>, vector<16x96xf32> -> vector<16x96xf32>
    %c0_3 = arith.constant 0 : index
    %c0_4 = arith.constant 0 : index
    %3 = vector.load %arg3[%c0_3, %c0_4] : memref<16x96xf32, #tpu.memory_space<vmem>>, vector<16x96xf32>
    %4 = arith.addf %2, %3 : vector<16x96xf32>
    %5 = vector.extract_strided_slice %4 {offsets = [0, 0], sizes = [16, 32], strides = [1, 1]} : vector<16x96xf32> to vector<16x32xf32>
    %6 = vector.shape_cast %5 : vector<16x32xf32> to vector<2x8x32xf32>
    %7 = vector.extract_strided_slice %4 {offsets = [0, 32], sizes = [16, 32], strides = [1, 1]} : vector<16x96xf32> to vector<16x32xf32>
    %8 = vector.shape_cast %7 : vector<16x32xf32> to vector<2x8x32xf32>
    %9 = vector.extract_strided_slice %4 {offsets = [0, 64], sizes = [16, 32], strides = [1, 1]} : vector<16x96xf32> to vector<16x32xf32>
    %10 = vector.shape_cast %9 : vector<16x32xf32> to vector<2x8x32xf32>
    %11 = vector.extract_strided_slice %6 {offsets = [0, 0, 0], sizes = [2, 8, 8], strides = [1, 1, 1]} : vector<2x8x32xf32> to vector<2x8x8xf32>
    %12 = vector.extract_strided_slice %8 {offsets = [0, 0, 0], sizes = [2, 8, 8], strides = [1, 1, 1]} : vector<2x8x32xf32> to vector<2x8x8xf32>
    %13 = vector.extract_strided_slice %10 {offsets = [0, 0, 0], sizes = [2, 8, 8], strides = [1, 1, 1]} : vector<2x8x32xf32> to vector<2x8x8xf32>
    "tpu.trace_start"() <{level = 10 : i32, message = "bld,bmd->blm"}> : () -> ()
    %cst_5 = arith.constant dense<0.000000e+00> : vector<2x8x8xf32>
    %14 = tpu.matmul %11, %12, %cst_5 {dimension_numbers = #tpu.dot_dimension_numbers<[2], [2], [1], [1], [0, 0, 0, 1, 1, 1], [0], [0]>} : vector<2x8x8xf32>, vector<2x8x8xf32>, vector<2x8x8xf32> -> vector<2x8x8xf32>
    "tpu.trace_stop"() : () -> ()
    %cst_6 = arith.constant dense<0xFF800000> : vector<2x8xf32>
    %15 = vector.multi_reduction <maximumf>, %14, %cst_6 [2] : vector<2x8x8xf32> to vector<2x8xf32>
    %16 = vector.shape_cast %15 : vector<2x8xf32> to vector<2x8x1xf32>
    %17 = vector.broadcast %16 : vector<2x8x1xf32> to vector<2x8x8xf32>
    %18 = arith.subf %14, %17 : vector<2x8x8xf32>
    %19 = math.exp %18 : vector<2x8x8xf32>
    %cst_7 = arith.constant dense<0.000000e+00> : vector<2x8xf32>
    %20 = vector.multi_reduction <add>, %19, %cst_7 [2] : vector<2x8x8xf32> to vector<2x8xf32>
    %21 = vector.shape_cast %20 : vector<2x8xf32> to vector<2x8x1xf32>
    %22 = vector.broadcast %21 : vector<2x8x1xf32> to vector<2x8x8xf32>
    %23 = arith.divf %19, %22 : vector<2x8x8xf32>
    "tpu.trace_start"() <{level = 10 : i32, message = "blm,bmd->bld"}> : () -> ()
    %cst_8 = arith.constant dense<0.000000e+00> : vector<2x8x8xf32>
    %24 = tpu.matmul %23, %13, %cst_8 {dimension_numbers = #tpu.dot_dimension_numbers<[2], [1], [1], [2], [0, 0, 0, 1, 1, 2], [0], [0]>} : vector<2x8x8xf32>, vector<2x8x8xf32>, vector<2x8x8xf32> -> vector<2x8x8xf32>
    "tpu.trace_stop"() : () -> ()
    %25 = vector.shape_cast %24 : vector<2x8x8xf32> to vector<16x8xf32>
    %26 = vector.extract_strided_slice %6 {offsets = [0, 0, 8], sizes = [2, 8, 8], strides = [1, 1, 1]} : vector<2x8x32xf32> to vector<2x8x8xf32>
    %27 = vector.extract_strided_slice %8 {offsets = [0, 0, 8], sizes = [2, 8, 8], strides = [1, 1, 1]} : vector<2x8x32xf32> to vector<2x8x8xf32>
    %28 = vector.extract_strided_slice %10 {offsets = [0, 0, 8], sizes = [2, 8, 8], strides = [1, 1, 1]} : vector<2x8x32xf32> to vector<2x8x8xf32>
    "tpu.trace_start"() <{level = 10 : i32, message = "bld,bmd->blm"}> : () -> ()
    %cst_9 = arith.constant dense<0.000000e+00> : vector<2x8x8xf32>
    %29 = tpu.matmul %26, %27, %cst_9 {dimension_numbers = #tpu.dot_dimension_numbers<[2], [2], [1], [1], [0, 0, 0, 1, 1, 1], [0], [0]>} : vector<2x8x8xf32>, vector<2x8x8xf32>, vector<2x8x8xf32> -> vector<2x8x8xf32>
    "tpu.trace_stop"() : () -> ()
    %cst_10 = arith.constant dense<0xFF800000> : vector<2x8xf32>
    %30 = vector.multi_reduction <maximumf>, %29, %cst_10 [2] : vector<2x8x8xf32> to vector<2x8xf32>
    %31 = vector.shape_cast %30 : vector<2x8xf32> to vector<2x8x1xf32>
    %32 = vector.broadcast %31 : vector<2x8x1xf32> to vector<2x8x8xf32>
    %33 = arith.subf %29, %32 : vector<2x8x8xf32>
    %34 = math.exp %33 : vector<2x8x8xf32>
    %cst_11 = arith.constant dense<0.000000e+00> : vector<2x8xf32>
    %35 = vector.multi_reduction <add>, %34, %cst_11 [2] : vector<2x8x8xf32> to vector<2x8xf32>
    %36 = vector.shape_cast %35 : vector<2x8xf32> to vector<2x8x1xf32>
    %37 = vector.broadcast %36 : vector<2x8x1xf32> to vector<2x8x8xf32>
    %38 = arith.divf %34, %37 : vector<2x8x8xf32>
    "tpu.trace_start"() <{level = 10 : i32, message = "blm,bmd->bld"}> : () -> ()
    %cst_12 = arith.constant dense<0.000000e+00> : vector<2x8x8xf32>
    %39 = tpu.matmul %38, %28, %cst_12 {dimension_numbers = #tpu.dot_dimension_numbers<[2], [1], [1], [2], [0, 0, 0, 1, 1, 2], [0], [0]>} : vector<2x8x8xf32>, vector<2x8x8xf32>, vector<2x8x8xf32> -> vector<2x8x8xf32>
    "tpu.trace_stop"() : () -> ()
    %40 = vector.shape_cast %39 : vector<2x8x8xf32> to vector<16x8xf32>
    %41 = vector.extract_strided_slice %6 {offsets = [0, 0, 16], sizes = [2, 8, 8], strides = [1, 1, 1]} : vector<2x8x32xf32> to vector<2x8x8xf32>
    %42 = vector.extract_strided_slice %8 {offsets = [0, 0, 16], sizes = [2, 8, 8], strides = [1, 1, 1]} : vector<2x8x32xf32> to vector<2x8x8xf32>
    %43 = vector.extract_strided_slice %10 {offsets = [0, 0, 16], sizes = [2, 8, 8], strides = [1, 1, 1]} : vector<2x8x32xf32> to vector<2x8x8xf32>
    "tpu.trace_start"() <{level = 10 : i32, message = "bld,bmd->blm"}> : () -> ()
    %cst_13 = arith.constant dense<0.000000e+00> : vector<2x8x8xf32>
    %44 = tpu.matmul %41, %42, %cst_13 {dimension_numbers = #tpu.dot_dimension_numbers<[2], [2], [1], [1], [0, 0, 0, 1, 1, 1], [0], [0]>} : vector<2x8x8xf32>, vector<2x8x8xf32>, vector<2x8x8xf32> -> vector<2x8x8xf32>
    "tpu.trace_stop"() : () -> ()
    %cst_14 = arith.constant dense<0xFF800000> : vector<2x8xf32>
    %45 = vector.multi_reduction <maximumf>, %44, %cst_14 [2] : vector<2x8x8xf32> to vector<2x8xf32>
    %46 = vector.shape_cast %45 : vector<2x8xf32> to vector<2x8x1xf32>
    %47 = vector.broadcast %46 : vector<2x8x1xf32> to vector<2x8x8xf32>
    %48 = arith.subf %44, %47 : vector<2x8x8xf32>
    %49 = math.exp %48 : vector<2x8x8xf32>
    %cst_15 = arith.constant dense<0.000000e+00> : vector<2x8xf32>
    %50 = vector.multi_reduction <add>, %49, %cst_15 [2] : vector<2x8x8xf32> to vector<2x8xf32>
    %51 = vector.shape_cast %50 : vector<2x8xf32> to vector<2x8x1xf32>
    %52 = vector.broadcast %51 : vector<2x8x1xf32> to vector<2x8x8xf32>
    %53 = arith.divf %49, %52 : vector<2x8x8xf32>
    "tpu.trace_start"() <{level = 10 : i32, message = "blm,bmd->bld"}> : () -> ()
    %cst_16 = arith.constant dense<0.000000e+00> : vector<2x8x8xf32>
    %54 = tpu.matmul %53, %43, %cst_16 {dimension_numbers = #tpu.dot_dimension_numbers<[2], [1], [1], [2], [0, 0, 0, 1, 1, 2], [0], [0]>} : vector<2x8x8xf32>, vector<2x8x8xf32>, vector<2x8x8xf32> -> vector<2x8x8xf32>
    "tpu.trace_stop"() : () -> ()
    %55 = vector.shape_cast %54 : vector<2x8x8xf32> to vector<16x8xf32>
    %56 = vector.extract_strided_slice %6 {offsets = [0, 0, 24], sizes = [2, 8, 8], strides = [1, 1, 1]} : vector<2x8x32xf32> to vector<2x8x8xf32>
    %57 = vector.extract_strided_slice %8 {offsets = [0, 0, 24], sizes = [2, 8, 8], strides = [1, 1, 1]} : vector<2x8x32xf32> to vector<2x8x8xf32>
    %58 = vector.extract_strided_slice %10 {offsets = [0, 0, 24], sizes = [2, 8, 8], strides = [1, 1, 1]} : vector<2x8x32xf32> to vector<2x8x8xf32>
    "tpu.trace_start"() <{level = 10 : i32, message = "bld,bmd->blm"}> : () -> ()
    %cst_17 = arith.constant dense<0.000000e+00> : vector<2x8x8xf32>
    %59 = tpu.matmul %56, %57, %cst_17 {dimension_numbers = #tpu.dot_dimension_numbers<[2], [2], [1], [1], [0, 0, 0, 1, 1, 1], [0], [0]>} : vector<2x8x8xf32>, vector<2x8x8xf32>, vector<2x8x8xf32> -> vector<2x8x8xf32>
    "tpu.trace_stop"() : () -> ()
    %cst_18 = arith.constant dense<0xFF800000> : vector<2x8xf32>
    %60 = vector.multi_reduction <maximumf>, %59, %cst_18 [2] : vector<2x8x8xf32> to vector<2x8xf32>
    %61 = vector.shape_cast %60 : vector<2x8xf32> to vector<2x8x1xf32>
    %62 = vector.broadcast %61 : vector<2x8x1xf32> to vector<2x8x8xf32>
    %63 = arith.subf %59, %62 : vector<2x8x8xf32>
    %64 = math.exp %63 : vector<2x8x8xf32>
    %cst_19 = arith.constant dense<0.000000e+00> : vector<2x8xf32>
    %65 = vector.multi_reduction <add>, %64, %cst_19 [2] : vector<2x8x8xf32> to vector<2x8xf32>
    %66 = vector.shape_cast %65 : vector<2x8xf32> to vector<2x8x1xf32>
    %67 = vector.broadcast %66 : vector<2x8x1xf32> to vector<2x8x8xf32>
    %68 = arith.divf %64, %67 : vector<2x8x8xf32>
    "tpu.trace_start"() <{level = 10 : i32, message = "blm,bmd->bld"}> : () -> ()
    %cst_20 = arith.constant dense<0.000000e+00> : vector<2x8x8xf32>
    %69 = tpu.matmul %68, %58, %cst_20 {dimension_numbers = #tpu.dot_dimension_numbers<[2], [1], [1], [2], [0, 0, 0, 1, 1, 2], [0], [0]>} : vector<2x8x8xf32>, vector<2x8x8xf32>, vector<2x8x8xf32> -> vector<2x8x8xf32>
    "tpu.trace_stop"() : () -> ()
    %70 = vector.shape_cast %69 : vector<2x8x8xf32> to vector<16x8xf32>
    %71 = tpu.concatenate %25, %40, %55, %70 in 1 : vector<16x8xf32>, vector<16x8xf32>, vector<16x8xf32>, vector<16x8xf32> -> vector<16x32xf32>
    %c0_21 = arith.constant 0 : index
    %c0_22 = arith.constant 0 : index
    %72 = vector.load %arg4[%c0_21, %c0_22] : memref<32x32xf32, #tpu.memory_space<vmem>>, vector<32x32xf32>
    %cst_23 = arith.constant dense<0.000000e+00> : vector<16x32xf32>
    %73 = tpu.matmul %71, %72, %cst_23 {dimension_numbers = #tpu.dot_dimension_numbers<[1], [0], [0], [1], [0, 0, 1, 1], [], []>} : vector<16x32xf32>, vector<32x32xf32>, vector<16x32xf32> -> vector<16x32xf32>
    %c0_24 = arith.constant 0 : index
    %c0_25 = arith.constant 0 : index
    %74 = vector.load %arg5[%c0_24, %c0_25] : memref<1x32xf32, #tpu.memory_space<vmem>>, vector<1x32xf32>
    %75 = vector.broadcast %74 : vector<1x32xf32> to vector<16x32xf32>
    %76 = arith.addf %73, %75 : vector<16x32xf32>
    %c0_26 = arith.constant 0 : index
    %c0_27 = arith.constant 0 : index
    %77 = vector.load %arg6[%c0_26, %c0_27] : memref<16x32xf32, #tpu.memory_space<vmem>>, vector<16x32xf32>
    tpu.vector_store %arg6[%c0_26, %c0_27], %76 {strides = array<i32>} : memref<16x32xf32, #tpu.memory_space<vmem>>, vector<16x32xf32>,
    return
  }
  func.func @transform_0(%arg0: i32) -> (i32, i32) {
    %c0_i32 = arith.constant 0 : i32
    %c0_i32_0 = arith.constant 0 : i32
    %c0_i32_1 = arith.constant 0 : i32
    return %c0_i32, %c0_i32_0 : i32, i32
  }
  func.func @transform_1(%arg0: i32) -> (i32, i32) {
    %c0_i32 = arith.constant 0 : i32
    %c0_i32_0 = arith.constant 0 : i32
    %c0_i32_1 = arith.constant 0 : i32
    return %c0_i32, %c0_i32_0 : i32, i32
  }
  func.func @transform_2(%arg0: i32) -> (i32, i32) {
    %c0_i32 = arith.constant 0 : i32
    %c0_i32_0 = arith.constant 0 : i32
    %c0_i32_1 = arith.constant 0 : i32
    return %c0_i32, %c0_i32_0 : i32, i32
  }
  func.func @transform_3(%arg0: i32) -> (i32, i32) {
    %c0_i32 = arith.constant 0 : i32
    %c0_i32_0 = arith.constant 0 : i32
    %c0_i32_1 = arith.constant 0 : i32
    return %c0_i32, %c0_i32_0 : i32, i32
  }
  func.func @transform_4(%arg0: i32) -> (i32, i32) {
    %c0_i32 = arith.constant 0 : i32
    %c0_i32_0 = arith.constant 0 : i32
    %c0_i32_1 = arith.constant 0 : i32
    return %c0_i32, %c0_i32_0 : i32, i32
  }
  func.func @transform_5(%arg0: i32) -> (i32, i32) {
    %c0_i32 = arith.constant 0 : i32
    %c0_i32_0 = arith.constant 0 : i32
    %c0_i32_1 = arith.constant 0 : i32
    return %c0_i32, %c0_i32_0 : i32, i32
  }
}

</mosaic_0001>

<llo_original>
// kernel: tpu_custom_call.1
$region0: #{tpu_custom_call.1}
  #allocation0 [shape = 'u32[]', space=smem, size = 0x4, offset = 0x4, fixed_abs, tag = 'smem constant byte address 0x4 - core index']
  #allocation1 [shape = 'u32[72,128]{1,0:T(1,128)}', space=vmem, size = 0x9000, scoped, tag = 'internal scratch']
  %s0 = inlined_call_operand.hbm [shape: f32[16,32], index: 0, kind: input, shape index: {}]
  %s1 = inlined_call_operand.hbm [shape: f32[32,96], index: 1, kind: input, shape index: {}]
  %s2 = inlined_call_operand.hbm [shape: f32[16,96], index: 2, kind: input, shape index: {}]
  %s3 = inlined_call_operand.hbm [shape: f32[32,32], index: 3, kind: input, shape index: {}]
  %s4 = inlined_call_operand.vmem [shape: f32[1,32], index: 4, kind: input, shape index: {}]
  %s5 = inlined_call_operand.hbm [shape: f32[16,32], index: 5, kind: output, shape index: {}]
  %s6 = sld [smem:[#allocation0]]
  $region46: #{tpu_custom_call.1} parent=0
    _
  %s8 = ssub.s32 1, %s6
  %s9 = scalar_select 0, %s8, %s6
  $region1: #{tpu_custom_call.1} parent=0
    #allocation2 [shape = 'u8[8192]{0}', space=vmem, size = 0x2000, scoped, tag = 'input window, operand 0, single buffered']
    #allocation3 [shape = 's32[1]{0}', space=sflag, size = 0x4, scoped, tag = 'scoped memory for tpu_custom_call.1']
    #allocation4 [shape = 's32[1]{0}', space=sflag, size = 0x4, scoped, tag = 'scoped memory for tpu_custom_call.1']
    #allocation5 [shape = 'u8[16384]{0}', space=vmem, size = 0x4000, scoped, tag = 'input window, operand 1, single buffered']
    #allocation6 [shape = 's32[1]{0}', space=sflag, size = 0x4, scoped, tag = 'scoped memory for tpu_custom_call.1']
    #allocation7 [shape = 'u8[8192]{0}', space=vmem, size = 0x2000, scoped, tag = 'input window, operand 2, single buffered']
    #allocation8 [shape = 'u8[16384]{0}', space=vmem, size = 0x4000, scoped, tag = 'input window, operand 3, single buffered']
    #allocation9 [shape = 's32[1]{0}', space=sflag, size = 0x4, scoped, tag = 'scoped memory for tpu_custom_call.1']
    #allocation10 [shape = 'u8[8192]{0}', space=vmem, size = 0x2000, scoped, tag = 'output window, operand 0, single buffered']
    %10 = vsyncpa [#allocation3], 0
    %11 = vsyncpa [#allocation6], 0
    %12 = vsyncpa [#allocation9], 0
    %13 = vsyncpa [#allocation4], 0
    // Predicated region
    $region2: #{tpu_custom_call.1} parent=1 // pred_check
      _
    $region3: #{tpu_custom_call.1} parent=1 // pred_check_branch
      %15 = sbr.rel (0) target = $region5
    $region4: #{tpu_custom_call.1} parent=1 // pred_region
      %17 = vsyncadd [#allocation3], 0
      %s18 = sshll.u32 %s0, 4
      %s19 = int_to_ptr.hbm [resolvable:$true] %s18
      %s20 = sshll.u32 [#allocation2], 4
      %s21 = int_to_ptr.vmem [resolvable:$true] %s20
      %26 = dma.hbm_to_vmem [thread:$0]  %s19, 256, %s21, [#allocation3], 128, 128, 8
    $region5: #{tpu_custom_call.1} parent=1 // pred_fallthru
      _
    // Predicated region
    $region6: #{tpu_custom_call.1} parent=1 // pred_check
      _
    $region7: #{tpu_custom_call.1} parent=1 // pred_check_branch
      %28 = sbr.rel (0) target = $region9
    $region8: #{tpu_custom_call.1} parent=1 // pred_region
      %30 = vsyncadd [#allocation6], 0
      %s31 = sshll.u32 %s1, 4
      %s32 = int_to_ptr.hbm [resolvable:$true] %s31
      %s33 = sshll.u32 [#allocation5], 4
      %s34 = int_to_ptr.vmem [resolvable:$true] %s33
      %39 = dma.hbm_to_vmem [thread:$0]  %s32, 512, %s34, [#allocation6], 128, 128, 8
    $region9: #{tpu_custom_call.1} parent=1 // pred_fallthru
      _
    // Predicated region
    $region10: #{tpu_custom_call.1} parent=1 // pred_check
      _
    $region11: #{tpu_custom_call.1} parent=1 // pred_check_branch
      %41 = sbr.rel (0) target = $region13
    $region12: #{tpu_custom_call.1} parent=1 // pred_region
      %43 = vsyncadd [#allocation6], 0
      %s44 = sshll.u32 %s2, 4
      %s45 = int_to_ptr.hbm [resolvable:$true] %s44
      %s46 = sshll.u32 [#allocation7], 4
      %s47 = int_to_ptr.vmem [resolvable:$true] %s46
      %52 = dma.hbm_to_vmem [thread:$0]  %s45, 256, %s47, [#allocation6], 128, 128, 8
    $region13: #{tpu_custom_call.1} parent=1 // pred_fallthru
      _
    // Predicated region
    $region14: #{tpu_custom_call.1} parent=1 // pred_check
      _
    $region15: #{tpu_custom_call.1} parent=1 // pred_check_branch
      %54 = sbr.rel (0) target = $region17
    $region16: #{tpu_custom_call.1} parent=1 // pred_region
      %56 = vsyncadd [#allocation9], 0
      %s57 = sshll.u32 %s3, 4
      %s58 = int_to_ptr.hbm [resolvable:$true] %s57
      %s59 = sshll.u32 [#allocation8], 4
      %s60 = int_to_ptr.vmem [resolvable:$true] %s59
      %65 = dma.hbm_to_vmem [thread:$0]  %s58, 512, %s60, [#allocation9], 128, 128, 8
    $region17: #{tpu_custom_call.1} parent=1 // pred_fallthru
      _
    // Predicated region
    $region18: #{tpu_custom_call.1} parent=1 // pred_check
      _
    $region19: #{tpu_custom_call.1} parent=1 // pred_check_branch
      %67 = sbr.rel (0) target = $region21
    $region20: #{tpu_custom_call.1} parent=1 // pred_region
      _
    $region21: #{tpu_custom_call.1} parent=1 // pred_fallthru
      _
    // Predicated region
    $region22: #{tpu_custom_call.1} parent=1 // pred_check
      _
    $region23: #{tpu_custom_call.1} parent=1 // pred_check_branch
      %69 = sbr.rel (0) target = $region25
    $region24: #{tpu_custom_call.1} parent=1 // pred_region
      %71 = dma.done [#allocation3], 256
    $region25: #{tpu_custom_call.1} parent=1 // pred_fallthru
      _
    // Predicated region
    $region26: #{tpu_custom_call.1} parent=1 // pred_check
      _
    $region27: #{tpu_custom_call.1} parent=1 // pred_check_branch
      %73 = sbr.rel (0) target = $region29
    $region28: #{tpu_custom_call.1} parent=1 // pred_region
      %75 = dma.done [#allocation6], 512
    $region29: #{tpu_custom_call.1} parent=1 // pred_fallthru
      _
    // Predicated region
    $region30: #{tpu_custom_call.1} parent=1 // pred_check
      _
    $region31: #{tpu_custom_call.1} parent=1 // pred_check_branch
      %77 = sbr.rel (0) target = $region33
    $region32: #{tpu_custom_call.1} parent=1 // pred_region
      %79 = dma.done [#allocation6], 256
    $region33: #{tpu_custom_call.1} parent=1 // pred_fallthru
      _
    // Predicated region
    $region34: #{tpu_custom_call.1} parent=1 // pred_check
      _
    $region35: #{tpu_custom_call.1} parent=1 // pred_check_branch
      %81 = sbr.rel (0) target = $region37
    $region36: #{tpu_custom_call.1} parent=1 // pred_region
      %83 = dma.done [#allocation9], 512
    $region37: #{tpu_custom_call.1} parent=1 // pred_fallthru
      _
    %v84 = vld [vmem:[#allocation2] sm:$0xff]
    %v85 = vld [vmem:[#allocation2 + $0x8] sm:$0xff]
    %v86 = vld [vmem:[#allocation5] sm:$0xff]
    %v87 = vld [vmem:[#allocation5 + $0x8] sm:$0xff]
    %v88 = vld [vmem:[#allocation5 + $0x10] sm:$0xff]
    %v89 = vld [vmem:[#allocation5 + $0x18] sm:$0xff]
    %v90 = vld [vmem:[#allocation7] sm:$0xff]
    %v91 = vld [vmem:[#allocation7 + $0x8] sm:$0xff]
    %vm92 = vcmask 261120
    %v94 = vsel %vm92, %v84, 0
    %v97 = vsel %vm92, %v85, 0
    %99 = vmatpush.msra.mxu0 0.0
    %100 = vmatpush.msra.mxu0 0.0
    %101 = vmatpush.msra.mxu0 0.0
    %102 = vmatpush.msra.mxu0 0.0
    %103 = vmatpush.msra.mxu0 0.0
    %104 = vmatpush.msra.mxu0 0.0
    %105 = vmatpush.msra.mxu0 0.0
    %106 = vmatpush.msra.mxu0 0.0
    %107 = vmatpush.msra.mxu0 0.0
    %108 = vmatpush.msra.mxu0 0.0
    %109 = vmatpush.msra.mxu0 0.0
    %110 = vmatpush.msra.mxu0 0.0
    %111 = vmatpush.msra.mxu0 %v89
    %112 = vmatpush.msra.mxu0 %v88
    %113 = vmatpush.msra.mxu0 %v87
    %114 = vmatpush.msra.mxu0 %v86
    %115 = vmatmul.f32.gmra.mxu0 %v94
    %v116 = vpop.f32.mrf.mxu0
    %v117 = vadd.f32 %v90, %v116
    %118 = vmatmul.f32.gmra.mxu0 %v97
    %v119 = vpop.f32.mrf.mxu0
    %v120 = vadd.f32 %v91, %v119
    %121 = vdwg.mxu0
    %123 = vrot.lane.b32.xlu0 %v117, 96
    %v124 = vpop.permute.xlu0 %123
    %vm125 = vcmask 64512
    %v126 = vsel %vm125, %v117, 0
    %v128 = vsel %vm125, %v124, 0
    %130 = vmatpush.xpose.msra.mxu0 0.0
    %131 = vmatpush.xpose.msra.mxu0 0.0
    %132 = vmatpush.xpose.msra.mxu0 0.0
    %133 = vmatpush.xpose.msra.mxu0 0.0
    %134 = vmatpush.xpose.msra.mxu0 0.0
    %135 = vmatpush.xpose.msra.mxu0 0.0
    %136 = vmatpush.xpose.msra.mxu0 0.0
    %137 = vmatpush.xpose.msra.mxu0 0.0
    %138 = vmatpush.xpose.msra.mxu0 0.0
    %139 = vmatpush.xpose.msra.mxu0 0.0
    %140 = vmatpush.xpose.msra.mxu0 0.0
    %141 = vmatpush.xpose.msra.mxu0 0.0
    %142 = vmatpush.xpose.msra.mxu0 0.0
    %143 = vmatpush.xpose.msra.mxu0 0.0
    %144 = vmatpush.xpose.msra.mxu0 0.0
    %145 = vmatpush.xpose.msra.mxu0 %v128
    %146 = vmatmul.f32.gmra.mxu0 %v126
    %v147 = vpop.f32.mrf.mxu0
    %v148 = vadd.f32 0.0, %v147
    %149 = vdwg.mxu0
    %151 = vrot.lane.b32.xlu0 %v120, 96
    %v152 = vpop.permute.xlu0 %151
    %v153 = vsel %vm125, %v120, 0
    %v155 = vsel %vm125, %v152, 0
    %157 = vmatpush.xpose.msra.mxu0 0.0
    %158 = vmatpush.xpose.msra.mxu0 0.0
    %159 = vmatpush.xpose.msra.mxu0 0.0
    %160 = vmatpush.xpose.msra.mxu0 0.0
    %161 = vmatpush.xpose.msra.mxu0 0.0
    %162 = vmatpush.xpose.msra.mxu0 0.0
    %163 = vmatpush.xpose.msra.mxu0 0.0
    %164 = vmatpush.xpose.msra.mxu0 0.0
    %165 = vmatpush.xpose.msra.mxu0 0.0
    %166 = vmatpush.xpose.msra.mxu0 0.0
    %167 = vmatpush.xpose.msra.mxu0 0.0
    %168 = vmatpush.xpose.msra.mxu0 0.0
    %169 = vmatpush.xpose.msra.mxu0 0.0
    %170 = vmatpush.xpose.msra.mxu0 0.0
    %171 = vmatpush.xpose.msra.mxu0 0.0
    %172 = vmatpush.xpose.msra.mxu0 %v155
    %173 = vmatmul.f32.gmra.mxu0 %v153
    %v174 = vpop.f32.mrf.mxu0
    %v175 = vadd.f32 0.0, %v174
    %176 = vdwg.mxu0
    %v177 = vsel %vm125, %v148, -inf
    %178 = vmax.xlane.f32.xlu0 %v177
    %v179 = vpop.xlane.xlu0 %178
    %v180 = vsel %vm125, %v175, -inf
    %181 = vmax.xlane.f32.xlu0 %v180
    %v182 = vpop.xlane.xlu0 %181
    %v183 = vsub.f32 %v148, %v179
    %v184 = vsub.f32 %v175, %v182
    %v185 = vmul.f32 %v183, 1.442695
    %v186 = vpow.pop %v185
    %v187 = vmul.f32 %v184, 1.442695
    %v188 = vpow.pop %v187
    %v189 = vsel %vm125, %v186, 0.0
    %190 = vadd.xlane.f32.xlu0 %v189
    %v191 = vpop.xlane.xlu0 %190
    %v192 = vsel %vm125, %v188, 0.0
    %193 = vadd.xlane.f32.xlu0 %v192
    %v194 = vpop.xlane.xlu0 %193
    %v195 = vrcp.pop %v191
    %v196 = vmul.f32 %v191, %v195
    %v197 = vsub.f32 1.0, %v196
    %v198 = vmul.f32 %v195, %v197
    %v199 = vadd.f32 %v195, %v198
    %vm200 = vweird.f32 %v191
    %vm201 = vweird.f32 %v195
    %vm202 = vmor %vm200, %vm201
    %v203 = vsel %vm202, %v195, %v199
    %v204 = vand.u32 2147483647, %v191
    %vm205 = vcmp.eq.f32.partialorder %v204, 8.507059e+37
    %v206 = vand.u32 %v191, 2147483648
    %v207 = vor.u32 1.1754944e-38, %v206
    %v208 = vsel %vm205, %v207, %v203
    %v209 = vmul.f32 %v186, %v208
    %v210 = vrcp.pop %v194
    %v211 = vmul.f32 %v194, %v210
    %v212 = vsub.f32 1.0, %v211
    %v213 = vmul.f32 %v210, %v212
    %v214 = vadd.f32 %v210, %v213
    %vm215 = vweird.f32 %v194
    %vm216 = vweird.f32 %v210
    %vm217 = vmor %vm215, %vm216
    %v218 = vsel %vm217, %v210, %v214
    %v219 = vand.u32 2147483647, %v194
    %vm220 = vcmp.eq.f32.partialorder %v219, 8.507059e+37
    %v221 = vand.u32 %v194, 2147483648
    %v222 = vor.u32 1.1754944e-38, %v221
    %v223 = vsel %vm220, %v222, %v218
    %v224 = vmul.f32 %v188, %v223
    %225 = vrot.lane.b32.xlu0 %v117, 64
    %v226 = vpop.permute.xlu0 %225
    %v229 = vsel %vm125, %v209, 0
    %231 = vmatpush.msra.mxu0 0.0
    %232 = vmatpush.msra.mxu0 0.0
    %233 = vmatpush.msra.mxu0 0.0
    %234 = vmatpush.msra.mxu0 0.0
    %235 = vmatpush.msra.mxu0 0.0
    %236 = vmatpush.msra.mxu0 0.0
    %237 = vmatpush.msra.mxu0 0.0
    %238 = vmatpush.msra.mxu0 0.0
    %239 = vmatpush.msra.mxu0 0.0
    %240 = vmatpush.msra.mxu0 0.0
    %241 = vmatpush.msra.mxu0 0.0
    %242 = vmatpush.msra.mxu0 0.0
    %243 = vmatpush.msra.mxu0 0.0
    %244 = vmatpush.msra.mxu0 0.0
    %245 = vmatpush.msra.mxu0 0.0
    %246 = vmatpush.msra.mxu0 %v226
    %247 = vmatmul.f32.gmra.mxu0 %v229
    %v248 = vpop.f32.mrf.mxu0
    %v249 = vadd.f32 0.0, %v248
    %250 = vdwg.mxu0
    %251 = vrot.lane.b32.xlu0 %v120, 64
    %v252 = vpop.permute.xlu0 %251
    %v255 = vsel %vm125, %v224, 0
    %257 = vmatpush.msra.mxu0 0.0
    %258 = vmatpush.msra.mxu0 0.0
    %259 = vmatpush.msra.mxu0 0.0
    %260 = vmatpush.msra.mxu0 0.0
    %261 = vmatpush.msra.mxu0 0.0
    %262 = vmatpush.msra.mxu0 0.0
    %263 = vmatpush.msra.mxu0 0.0
    %264 = vmatpush.msra.mxu0 0.0
    %265 = vmatpush.msra.mxu0 0.0
    %266 = vmatpush.msra.mxu0 0.0
    %267 = vmatpush.msra.mxu0 0.0
    %268 = vmatpush.msra.mxu0 0.0
    %269 = vmatpush.msra.mxu0 0.0
    %270 = vmatpush.msra.mxu0 0.0
    %271 = vmatpush.msra.mxu0 0.0
    %272 = vmatpush.msra.mxu0 %v252
    %273 = vmatmul.f32.gmra.mxu0 %v255
    %v274 = vpop.f32.mrf.mxu0
    %v275 = vadd.f32 0.0, %v274
    %276 = vdwg.mxu0
    %277 = vrot.lane.b32.xlu0 %v117, 120
    %v278 = vpop.permute.xlu0 %277
    %279 = vrot.lane.b32.xlu0 %v117, 88
    %v280 = vpop.permute.xlu0 %279
    %v281 = vsel %vm125, %v278, 0
    %v283 = vsel %vm125, %v280, 0
    %285 = vmatpush.xpose.msra.mxu0 0.0
    %286 = vmatpush.xpose.msra.mxu0 0.0
    %287 = vmatpush.xpose.msra.mxu0 0.0
    %288 = vmatpush.xpose.msra.mxu0 0.0
    %289 = vmatpush.xpose.msra.mxu0 0.0
    %290 = vmatpush.xpose.msra.mxu0 0.0
    %291 = vmatpush.xpose.msra.mxu0 0.0
    %292 = vmatpush.xpose.msra.mxu0 0.0
    %293 = vmatpush.xpose.msra.mxu0 0.0
    %294 = vmatpush.xpose.msra.mxu0 0.0
    %295 = vmatpush.xpose.msra.mxu0 0.0
    %296 = vmatpush.xpose.msra.mxu0 0.0
    %297 = vmatpush.xpose.msra.mxu0 0.0
    %298 = vmatpush.xpose.msra.mxu0 0.0
    %299 = vmatpush.xpose.msra.mxu0 0.0
    %300 = vmatpush.xpose.msra.mxu0 %v283
    %301 = vmatmul.f32.gmra.mxu0 %v281
    %v302 = vpop.f32.mrf.mxu0
    %v303 = vadd.f32 0.0, %v302
    %304 = vdwg.mxu0
    %305 = vrot.lane.b32.xlu0 %v120, 120
    %v306 = vpop.permute.xlu0 %305
    %307 = vrot.lane.b32.xlu0 %v120, 88
    %v308 = vpop.permute.xlu0 %307
    %v309 = vsel %vm125, %v306, 0
    %v311 = vsel %vm125, %v308, 0
    %313 = vmatpush.xpose.msra.mxu0 0.0
    %314 = vmatpush.xpose.msra.mxu0 0.0
    %315 = vmatpush.xpose.msra.mxu0 0.0
    %316 = vmatpush.xpose.msra.mxu0 0.0
    %317 = vmatpush.xpose.msra.mxu0 0.0
    %318 = vmatpush.xpose.msra.mxu0 0.0
    %319 = vmatpush.xpose.msra.mxu0 0.0
    %320 = vmatpush.xpose.msra.mxu0 0.0
    %321 = vmatpush.xpose.msra.mxu0 0.0
    %322 = vmatpush.xpose.msra.mxu0 0.0
    %323 = vmatpush.xpose.msra.mxu0 0.0
    %324 = vmatpush.xpose.msra.mxu0 0.0
    %325 = vmatpush.xpose.msra.mxu0 0.0
    %326 = vmatpush.xpose.msra.mxu0 0.0
    %327 = vmatpush.xpose.msra.mxu0 0.0
    %328 = vmatpush.xpose.msra.mxu0 %v311
    %329 = vmatmul.f32.gmra.mxu0 %v309
    %v330 = vpop.f32.mrf.mxu0
    %v331 = vadd.f32 0.0, %v330
    %332 = vdwg.mxu0
    %v333 = vsel %vm125, %v303, -inf
    %334 = vmax.xlane.f32.xlu0 %v333
    %v335 = vpop.xlane.xlu0 %334
    %v336 = vsel %vm125, %v331, -inf
    %337 = vmax.xlane.f32.xlu0 %v336
    %v338 = vpop.xlane.xlu0 %337
    %v339 = vsub.f32 %v303, %v335
    %v340 = vsub.f32 %v331, %v338
    %v341 = vmul.f32 %v339, 1.442695
    %v342 = vpow.pop %v341
    %v343 = vmul.f32 %v340, 1.442695
    %v344 = vpow.pop %v343
    %v345 = vsel %vm125, %v342, 0.0
    %346 = vadd.xlane.f32.xlu0 %v345
    %v347 = vpop.xlane.xlu0 %346
    %v348 = vsel %vm125, %v344, 0.0
    %349 = vadd.xlane.f32.xlu0 %v348
    %v350 = vpop.xlane.xlu0 %349
    %v351 = vrcp.pop %v347
    %v352 = vmul.f32 %v347, %v351
    %v353 = vsub.f32 1.0, %v352
    %v354 = vmul.f32 %v351, %v353
    %v355 = vadd.f32 %v351, %v354
    %vm356 = vweird.f32 %v347
    %vm357 = vweird.f32 %v351
    %vm358 = vmor %vm356, %vm357
    %v359 = vsel %vm358, %v351, %v355
    %v360 = vand.u32 2147483647, %v347
    %vm361 = vcmp.eq.f32.partialorder %v360, 8.507059e+37
    %v362 = vand.u32 %v347, 2147483648
    %v363 = vor.u32 1.1754944e-38, %v362
    %v364 = vsel %vm361, %v363, %v359
    %v365 = vmul.f32 %v342, %v364
    %v366 = vrcp.pop %v350
    %v367 = vmul.f32 %v350, %v366
    %v368 = vsub.f32 1.0, %v367
    %v369 = vmul.f32 %v366, %v368
    %v370 = vadd.f32 %v366, %v369
    %vm371 = vweird.f32 %v350
    %vm372 = vweird.f32 %v366
    %vm373 = vmor %vm371, %vm372
    %v374 = vsel %vm373, %v366, %v370
    %v375 = vand.u32 2147483647, %v350
    %vm376 = vcmp.eq.f32.partialorder %v375, 8.507059e+37
    %v377 = vand.u32 %v350, 2147483648
    %v378 = vor.u32 1.1754944e-38, %v377
    %v379 = vsel %vm376, %v378, %v374
    %v380 = vmul.f32 %v344, %v379
    %381 = vrot.lane.b32.xlu0 %v117, 56
    %v382 = vpop.permute.xlu0 %381
    %v385 = vsel %vm125, %v365, 0
    %387 = vmatpush.msra.mxu0 0.0
    %388 = vmatpush.msra.mxu0 0.0
    %389 = vmatpush.msra.mxu0 0.0
    %390 = vmatpush.msra.mxu0 0.0
    %391 = vmatpush.msra.mxu0 0.0
    %392 = vmatpush.msra.mxu0 0.0
    %393 = vmatpush.msra.mxu0 0.0
    %394 = vmatpush.msra.mxu0 0.0
    %395 = vmatpush.msra.mxu0 0.0
    %396 = vmatpush.msra.mxu0 0.0
    %397 = vmatpush.msra.mxu0 0.0
    %398 = vmatpush.msra.mxu0 0.0
    %399 = vmatpush.msra.mxu0 0.0
    %400 = vmatpush.msra.mxu0 0.0
    %401 = vmatpush.msra.mxu0 0.0
    %402 = vmatpush.msra.mxu0 %v382
    %403 = vmatmul.f32.gmra.mxu0 %v385
    %v404 = vpop.f32.mrf.mxu0
    %v405 = vadd.f32 0.0, %v404
    %406 = vdwg.mxu0
    %407 = vrot.lane.b32.xlu0 %v120, 56
    %v408 = vpop.permute.xlu0 %407
    %v411 = vsel %vm125, %v380, 0
    %413 = vmatpush.msra.mxu0 0.0
    %414 = vmatpush.msra.mxu0 0.0
    %415 = vmatpush.msra.mxu0 0.0
    %416 = vmatpush.msra.mxu0 0.0
    %417 = vmatpush.msra.mxu0 0.0
    %418 = vmatpush.msra.mxu0 0.0
    %419 = vmatpush.msra.mxu0 0.0
    %420 = vmatpush.msra.mxu0 0.0
    %421 = vmatpush.msra.mxu0 0.0
    %422 = vmatpush.msra.mxu0 0.0
    %423 = vmatpush.msra.mxu0 0.0
    %424 = vmatpush.msra.mxu0 0.0
    %425 = vmatpush.msra.mxu0 0.0
    %426 = vmatpush.msra.mxu0 0.0
    %427 = vmatpush.msra.mxu0 0.0
    %428 = vmatpush.msra.mxu0 %v408
    %429 = vmatmul.f32.gmra.mxu0 %v411
    %v430 = vpop.f32.mrf.mxu0
    %v431 = vadd.f32 0.0, %v430
    %432 = vdwg.mxu0
    %433 = vrot.lane.b32.xlu0 %v117, 112
    %v434 = vpop.permute.xlu0 %433
    %435 = vrot.lane.b32.xlu0 %v117, 80
    %v436 = vpop.permute.xlu0 %435
    %v437 = vsel %vm125, %v434, 0
    %v439 = vsel %vm125, %v436, 0
    %441 = vmatpush.xpose.msra.mxu0 0.0
    %442 = vmatpush.xpose.msra.mxu0 0.0
    %443 = vmatpush.xpose.msra.mxu0 0.0
    %444 = vmatpush.xpose.msra.mxu0 0.0
    %445 = vmatpush.xpose.msra.mxu0 0.0
    %446 = vmatpush.xpose.msra.mxu0 0.0
    %447 = vmatpush.xpose.msra.mxu0 0.0
    %448 = vmatpush.xpose.msra.mxu0 0.0
    %449 = vmatpush.xpose.msra.mxu0 0.0
    %450 = vmatpush.xpose.msra.mxu0 0.0
    %451 = vmatpush.xpose.msra.mxu0 0.0
    %452 = vmatpush.xpose.msra.mxu0 0.0
    %453 = vmatpush.xpose.msra.mxu0 0.0
    %454 = vmatpush.xpose.msra.mxu0 0.0
    %455 = vmatpush.xpose.msra.mxu0 0.0
    %456 = vmatpush.xpose.msra.mxu0 %v439
    %457 = vmatmul.f32.gmra.mxu0 %v437
    %v458 = vpop.f32.mrf.mxu0
    %v459 = vadd.f32 0.0, %v458
    %460 = vdwg.mxu0
    %461 = vrot.lane.b32.xlu0 %v120, 112
    %v462 = vpop.permute.xlu0 %461
    %463 = vrot.lane.b32.xlu0 %v120, 80
    %v464 = vpop.permute.xlu0 %463
    %v465 = vsel %vm125, %v462, 0
    %v467 = vsel %vm125, %v464, 0
    %469 = vmatpush.xpose.msra.mxu0 0.0
    %470 = vmatpush.xpose.msra.mxu0 0.0
    %471 = vmatpush.xpose.msra.mxu0 0.0
    %472 = vmatpush.xpose.msra.mxu0 0.0
    %473 = vmatpush.xpose.msra.mxu0 0.0
    %474 = vmatpush.xpose.msra.mxu0 0.0
    %475 = vmatpush.xpose.msra.mxu0 0.0
    %476 = vmatpush.xpose.msra.mxu0 0.0
    %477 = vmatpush.xpose.msra.mxu0 0.0
    %478 = vmatpush.xpose.msra.mxu0 0.0
    %479 = vmatpush.xpose.msra.mxu0 0.0
    %480 = vmatpush.xpose.msra.mxu0 0.0
    %481 = vmatpush.xpose.msra.mxu0 0.0
    %482 = vmatpush.xpose.msra.mxu0 0.0
    %483 = vmatpush.xpose.msra.mxu0 0.0
    %484 = vmatpush.xpose.msra.mxu0 %v467
    %485 = vmatmul.f32.gmra.mxu0 %v465
    %v486 = vpop.f32.mrf.mxu0
    %v487 = vadd.f32 0.0, %v486
    %488 = vdwg.mxu0
    %v489 = vsel %vm125, %v459, -inf
    %490 = vmax.xlane.f32.xlu0 %v489
    %v491 = vpop.xlane.xlu0 %490
    %v492 = vsel %vm125, %v487, -inf
    %493 = vmax.xlane.f32.xlu0 %v492
    %v494 = vpop.xlane.xlu0 %493
    %v495 = vsub.f32 %v459, %v491
    %v496 = vsub.f32 %v487, %v494
    %v497 = vmul.f32 %v495, 1.442695
    %v498 = vpow.pop %v497
    %v499 = vmul.f32 %v496, 1.442695
    %v500 = vpow.pop %v499
    %v501 = vsel %vm125, %v498, 0.0
    %502 = vadd.xlane.f32.xlu0 %v501
    %v503 = vpop.xlane.xlu0 %502
    %v504 = vsel %vm125, %v500, 0.0
    %505 = vadd.xlane.f32.xlu0 %v504
    %v506 = vpop.xlane.xlu0 %505
    %v507 = vrcp.pop %v503
    %v508 = vmul.f32 %v503, %v507
    %v509 = vsub.f32 1.0, %v508
    %v510 = vmul.f32 %v507, %v509
    %v511 = vadd.f32 %v507, %v510
    %vm512 = vweird.f32 %v503
    %vm513 = vweird.f32 %v507
    %vm514 = vmor %vm512, %vm513
    %v515 = vsel %vm514, %v507, %v511
    %v516 = vand.u32 2147483647, %v503
    %vm517 = vcmp.eq.f32.partialorder %v516, 8.507059e+37
    %v518 = vand.u32 %v503, 2147483648
    %v519 = vor.u32 1.1754944e-38, %v518
    %v520 = vsel %vm517, %v519, %v515
    %v521 = vmul.f32 %v498, %v520
    %v522 = vrcp.pop %v506
    %v523 = vmul.f32 %v506, %v522
    %v524 = vsub.f32 1.0, %v523
    %v525 = vmul.f32 %v522, %v524
    %v526 = vadd.f32 %v522, %v525
    %vm527 = vweird.f32 %v506
    %vm528 = vweird.f32 %v522
    %vm529 = vmor %vm527, %vm528
    %v530 = vsel %vm529, %v522, %v526
    %v531 = vand.u32 2147483647, %v506
    %vm532 = vcmp.eq.f32.partialorder %v531, 8.507059e+37
    %v533 = vand.u32 %v506, 2147483648
    %v534 = vor.u32 1.1754944e-38, %v533
    %v535 = vsel %vm532, %v534, %v530
    %v536 = vmul.f32 %v500, %v535
    %537 = vrot.lane.b32.xlu0 %v117, 48
    %v538 = vpop.permute.xlu0 %537
    %v541 = vsel %vm125, %v521, 0
    %543 = vmatpush.msra.mxu0 0.0
    %544 = vmatpush.msra.mxu0 0.0
    %545 = vmatpush.msra.mxu0 0.0
    %546 = vmatpush.msra.mxu0 0.0
    %547 = vmatpush.msra.mxu0 0.0
    %548 = vmatpush.msra.mxu0 0.0
    %549 = vmatpush.msra.mxu0 0.0
    %550 = vmatpush.msra.mxu0 0.0
    %551 = vmatpush.msra.mxu0 0.0
    %552 = vmatpush.msra.mxu0 0.0
    %553 = vmatpush.msra.mxu0 0.0
    %554 = vmatpush.msra.mxu0 0.0
    %555 = vmatpush.msra.mxu0 0.0
    %556 = vmatpush.msra.mxu0 0.0
    %557 = vmatpush.msra.mxu0 0.0
    %558 = vmatpush.msra.mxu0 %v538
    %559 = vmatmul.f32.gmra.mxu0 %v541
    %v560 = vpop.f32.mrf.mxu0
    %v561 = vadd.f32 0.0, %v560
    %562 = vdwg.mxu0
    %563 = vrot.lane.b32.xlu0 %v120, 48
    %v564 = vpop.permute.xlu0 %563
    %v567 = vsel %vm125, %v536, 0
    %569 = vmatpush.msra.mxu0 0.0
    %570 = vmatpush.msra.mxu0 0.0
    %571 = vmatpush.msra.mxu0 0.0
    %572 = vmatpush.msra.mxu0 0.0
    %573 = vmatpush.msra.mxu0 0.0
    %574 = vmatpush.msra.mxu0 0.0
    %575 = vmatpush.msra.mxu0 0.0
    %576 = vmatpush.msra.mxu0 0.0
    %577 = vmatpush.msra.mxu0 0.0
    %578 = vmatpush.msra.mxu0 0.0
    %579 = vmatpush.msra.mxu0 0.0
    %580 = vmatpush.msra.mxu0 0.0
    %581 = vmatpush.msra.mxu0 0.0
    %582 = vmatpush.msra.mxu0 0.0
    %583 = vmatpush.msra.mxu0 0.0
    %584 = vmatpush.msra.mxu0 %v564
    %585 = vmatmul.f32.gmra.mxu0 %v567
    %v586 = vpop.f32.mrf.mxu0
    %v587 = vadd.f32 0.0, %v586
    %588 = vdwg.mxu0
    %589 = vrot.lane.b32.xlu0 %v117, 104
    %v590 = vpop.permute.xlu0 %589
    %591 = vrot.lane.b32.xlu0 %v117, 72
    %v592 = vpop.permute.xlu0 %591
    %v593 = vsel %vm125, %v590, 0
    %v595 = vsel %vm125, %v592, 0
    %597 = vmatpush.xpose.msra.mxu0 0.0
    %598 = vmatpush.xpose.msra.mxu0 0.0
    %599 = vmatpush.xpose.msra.mxu0 0.0
    %600 = vmatpush.xpose.msra.mxu0 0.0
    %601 = vmatpush.xpose.msra.mxu0 0.0
    %602 = vmatpush.xpose.msra.mxu0 0.0
    %603 = vmatpush.xpose.msra.mxu0 0.0
    %604 = vmatpush.xpose.msra.mxu0 0.0
    %605 = vmatpush.xpose.msra.mxu0 0.0
    %606 = vmatpush.xpose.msra.mxu0 0.0
    %607 = vmatpush.xpose.msra.mxu0 0.0
    %608 = vmatpush.xpose.msra.mxu0 0.0
    %609 = vmatpush.xpose.msra.mxu0 0.0
    %610 = vmatpush.xpose.msra.mxu0 0.0
    %611 = vmatpush.xpose.msra.mxu0 0.0
    %612 = vmatpush.xpose.msra.mxu0 %v595
    %613 = vmatmul.f32.gmra.mxu0 %v593
    %v614 = vpop.f32.mrf.mxu0
    %v615 = vadd.f32 0.0, %v614
    %616 = vdwg.mxu0
    %617 = vrot.lane.b32.xlu0 %v120, 104
    %v618 = vpop.permute.xlu0 %617
    %619 = vrot.lane.b32.xlu0 %v120, 72
    %v620 = vpop.permute.xlu0 %619
    %v621 = vsel %vm125, %v618, 0
    %v623 = vsel %vm125, %v620, 0
    %625 = vmatpush.xpose.msra.mxu0 0.0
    %626 = vmatpush.xpose.msra.mxu0 0.0
    %627 = vmatpush.xpose.msra.mxu0 0.0
    %628 = vmatpush.xpose.msra.mxu0 0.0
    %629 = vmatpush.xpose.msra.mxu0 0.0
    %630 = vmatpush.xpose.msra.mxu0 0.0
    %631 = vmatpush.xpose.msra.mxu0 0.0
    %632 = vmatpush.xpose.msra.mxu0 0.0
    %633 = vmatpush.xpose.msra.mxu0 0.0
    %634 = vmatpush.xpose.msra.mxu0 0.0
    %635 = vmatpush.xpose.msra.mxu0 0.0
    %636 = vmatpush.xpose.msra.mxu0 0.0
    %637 = vmatpush.xpose.msra.mxu0 0.0
    %638 = vmatpush.xpose.msra.mxu0 0.0
    %639 = vmatpush.xpose.msra.mxu0 0.0
    %640 = vmatpush.xpose.msra.mxu0 %v623
    %641 = vmatmul.f32.gmra.mxu0 %v621
    %v642 = vpop.f32.mrf.mxu0
    %v643 = vadd.f32 0.0, %v642
    %644 = vdwg.mxu0
    %v645 = vsel %vm125, %v615, -inf
    %646 = vmax.xlane.f32.xlu0 %v645
    %v647 = vpop.xlane.xlu0 %646
    %v648 = vsel %vm125, %v643, -inf
    %649 = vmax.xlane.f32.xlu0 %v648
    %v650 = vpop.xlane.xlu0 %649
    %v651 = vsub.f32 %v615, %v647
    %v652 = vsub.f32 %v643, %v650
    %v653 = vmul.f32 %v651, 1.442695
    %v654 = vpow.pop %v653
    %v655 = vmul.f32 %v652, 1.442695
    %v656 = vpow.pop %v655
    %v657 = vsel %vm125, %v654, 0.0
    %658 = vadd.xlane.f32.xlu0 %v657
    %v659 = vpop.xlane.xlu0 %658
    %v660 = vsel %vm125, %v656, 0.0
    %661 = vadd.xlane.f32.xlu0 %v660
    %v662 = vpop.xlane.xlu0 %661
    %v663 = vrcp.pop %v659
    %v664 = vmul.f32 %v659, %v663
    %v665 = vsub.f32 1.0, %v664
    %v666 = vmul.f32 %v663, %v665
    %v667 = vadd.f32 %v663, %v666
    %vm668 = vweird.f32 %v659
    %vm669 = vweird.f32 %v663
    %vm670 = vmor %vm668, %vm669
    %v671 = vsel %vm670, %v663, %v667
    %v672 = vand.u32 2147483647, %v659
    %vm673 = vcmp.eq.f32.partialorder %v672, 8.507059e+37
    %v674 = vand.u32 %v659, 2147483648
    %v675 = vor.u32 1.1754944e-38, %v674
    %v676 = vsel %vm673, %v675, %v671
    %v677 = vmul.f32 %v654, %v676
    %v678 = vrcp.pop %v662
    %v679 = vmul.f32 %v662, %v678
    %v680 = vsub.f32 1.0, %v679
    %v681 = vmul.f32 %v678, %v680
    %v682 = vadd.f32 %v678, %v681
    %vm683 = vweird.f32 %v662
    %vm684 = vweird.f32 %v678
    %vm685 = vmor %vm683, %vm684
    %v686 = vsel %vm685, %v678, %v682
    %v687 = vand.u32 2147483647, %v662
    %vm688 = vcmp.eq.f32.partialorder %v687, 8.507059e+37
    %v689 = vand.u32 %v662, 2147483648
    %v690 = vor.u32 1.1754944e-38, %v689
    %v691 = vsel %vm688, %v690, %v686
    %v692 = vmul.f32 %v656, %v691
    %693 = vrot.lane.b32.xlu0 %v117, 40
    %v694 = vpop.permute.xlu0 %693
    %v697 = vsel %vm125, %v677, 0
    %699 = vmatpush.msra.mxu0 0.0
    %700 = vmatpush.msra.mxu0 0.0
    %701 = vmatpush.msra.mxu0 0.0
    %702 = vmatpush.msra.mxu0 0.0
    %703 = vmatpush.msra.mxu0 0.0
    %704 = vmatpush.msra.mxu0 0.0
    %705 = vmatpush.msra.mxu0 0.0
    %706 = vmatpush.msra.mxu0 0.0
    %707 = vmatpush.msra.mxu0 0.0
    %708 = vmatpush.msra.mxu0 0.0
    %709 = vmatpush.msra.mxu0 0.0
    %710 = vmatpush.msra.mxu0 0.0
    %711 = vmatpush.msra.mxu0 0.0
    %712 = vmatpush.msra.mxu0 0.0
    %713 = vmatpush.msra.mxu0 0.0
    %714 = vmatpush.msra.mxu0 %v694
    %715 = vmatmul.f32.gmra.mxu0 %v697
    %v716 = vpop.f32.mrf.mxu0
    %v717 = vadd.f32 0.0, %v716
    %718 = vdwg.mxu0
    %719 = vrot.lane.b32.xlu0 %v120, 40
    %v720 = vpop.permute.xlu0 %719
    %v723 = vsel %vm125, %v692, 0
    %725 = vmatpush.msra.mxu0 0.0
    %726 = vmatpush.msra.mxu0 0.0
    %727 = vmatpush.msra.mxu0 0.0
    %728 = vmatpush.msra.mxu0 0.0
    %729 = vmatpush.msra.mxu0 0.0
    %730 = vmatpush.msra.mxu0 0.0
    %731 = vmatpush.msra.mxu0 0.0
    %732 = vmatpush.msra.mxu0 0.0
    %733 = vmatpush.msra.mxu0 0.0
    %734 = vmatpush.msra.mxu0 0.0
    %735 = vmatpush.msra.mxu0 0.0
    %736 = vmatpush.msra.mxu0 0.0
    %737 = vmatpush.msra.mxu0 0.0
    %738 = vmatpush.msra.mxu0 0.0
    %739 = vmatpush.msra.mxu0 0.0
    %740 = vmatpush.msra.mxu0 %v720
    %741 = vmatmul.f32.gmra.mxu0 %v723
    %v742 = vpop.f32.mrf.mxu0
    %v743 = vadd.f32 0.0, %v742
    %744 = vdwg.mxu0
    %747 = vrot.lane.b32.xlu0 %v405, 8
    %v748 = vpop.permute.xlu0 %747
    %749 = vrot.lane.b32.xlu0 %v431, 8
    %v750 = vpop.permute.xlu0 %749
    %755 = vrot.lane.b32.xlu0 %v561, 16
    %v756 = vpop.permute.xlu0 %755
    %757 = vrot.lane.b32.xlu0 %v587, 16
    %v758 = vpop.permute.xlu0 %757
    %763 = vrot.lane.b32.xlu0 %v717, 24
    %v764 = vpop.permute.xlu0 %763
    %765 = vrot.lane.b32.xlu0 %v743, 24
    %v766 = vpop.permute.xlu0 %765
    %v769 = vsel %vm125, %v249, %v748
    %v770 = vsel %vm125, %v275, %v750
    %vm771 = vcmask 130048
    %v772 = vsel %vm771, %v769, %v756
    %v773 = vsel %vm771, %v770, %v758
    %vm774 = vcmask 195584
    %v775 = vsel %vm774, %v772, %v764
    %v776 = vsel %vm774, %v773, %v766
    %v777 = vld [vmem:[#allocation8] sm:$0xff]
    %v778 = vld [vmem:[#allocation8 + $0x8] sm:$0xff]
    %v779 = vld [vmem:[#allocation8 + $0x10] sm:$0xff]
    %v780 = vld [vmem:[#allocation8 + $0x18] sm:$0xff]
    %v781 = vld [vmem:[%s4] sm:$0x1]
    %v783 = vperm.slane %v781, 0
    %v786 = vsel %vm92, %v775, 0
    %v789 = vsel %vm92, %v776, 0
    %791 = vmatpush.msra.mxu0 0.0
    %792 = vmatpush.msra.mxu0 0.0
    %793 = vmatpush.msra.mxu0 0.0
    %794 = vmatpush.msra.mxu0 0.0
    %795 = vmatpush.msra.mxu0 0.0
    %796 = vmatpush.msra.mxu0 0.0
    %797 = vmatpush.msra.mxu0 0.0
    %798 = vmatpush.msra.mxu0 0.0
    %799 = vmatpush.msra.mxu0 0.0
    %800 = vmatpush.msra.mxu0 0.0
    %801 = vmatpush.msra.mxu0 0.0
    %802 = vmatpush.msra.mxu0 0.0
    %803 = vmatpush.msra.mxu0 %v780
    %804 = vmatpush.msra.mxu0 %v779
    %805 = vmatpush.msra.mxu0 %v778
    %806 = vmatpush.msra.mxu0 %v777
    %807 = vmatmul.f32.gmra.mxu0 %v786
    %v808 = vpop.f32.mrf.mxu0
    %v809 = vadd.f32 %v783, %v808
    %810 = vmatmul.f32.gmra.mxu0 %v789
    %v811 = vpop.f32.mrf.mxu0
    %v812 = vadd.f32 %v783, %v811
    %813 = vdwg.mxu0
    %814 = vst.msk [vmem:[#allocation10] sm:$0xff] %vm92, %v809
    %815 = vst.msk [vmem:[#allocation10 + $0x8] sm:$0xff] %vm92, %v812
    // Predicated region
    $region38: #{tpu_custom_call.1} parent=1 // pred_check
      _
    $region39: #{tpu_custom_call.1} parent=1 // pred_check_branch
      %817 = sbr.rel (0) target = $region41
    $region40: #{tpu_custom_call.1} parent=1 // pred_region
      %819 = vsyncadd [#allocation4], 0
      %s820 = sshll.u32 [#allocation10], 4
      %s821 = int_to_ptr.vmem [resolvable:$true] %s820
      %s822 = sshll.u32 %s5, 4
      %s823 = int_to_ptr.hbm [resolvable:$true] %s822
      %828 = dma.vmem_to_hbm [thread:$0]  %s821, 256, %s823, [#allocation4], 128, 128, 8
    $region41: #{tpu_custom_call.1} parent=1 // pred_fallthru
      _
    // Predicated region
    $region42: #{tpu_custom_call.1} parent=1 // pred_check
      _
    $region43: #{tpu_custom_call.1} parent=1 // pred_check_branch
      %830 = sbr.rel (0) target = $region45
    $region44: #{tpu_custom_call.1} parent=1 // pred_region
      %832 = dma.done [#allocation4], 256
    $region45: #{tpu_custom_call.1} parent=1 // pred_fallthru
      _
    %833 = vsyncpa [#allocation3], 1
    %834 = vsyncpa [#allocation6], 1
    %835 = vsyncpa [#allocation9], 1
    %836 = vsyncpa [#allocation4], 1

</llo_original>
